<compile_context>
chip_gen: v7x
topology: tpu7x:2x2x1
jax: 0.10.0
libtpu: 0.0.40
codegen_flags: <defaults>
</compile_context>

<pallas_src>
import math

import jax
import jax.numpy as jnp
from jax.experimental import pallas as pl
from jax.experimental.pallas import tpu as pltpu

N_S = 10                     # n_s (auxiliary / observation size)
N_AGENT = 5                  # n_agent
OUT = N_AGENT * N_AGENT      # 25
DA = OUT // 2                # 12  (dim_split_a)
DB = OUT - DA                # 13  (dim_split_b)
HID = 10                     # sub_network_cells
NLAYERS = 3                  # NF nlayers
SCALE_VALUE = 0.9            # ScaleLayer init (scale_mode='linear'), folded into head
LANES = 128                  # lane-padded working width
H2_OFF = 32                  # column block of the h2 activation inside the packed slab
H3_OFF = 64                  # column block of the h3 activation inside the packed slab


# ----------------------------------------------------------------------------
# Pallas kernel: one grid step per flow layer, state carried in VMEM scratch
# ----------------------------------------------------------------------------
def graphflows_kernel(
    aux_ref,     # VMEM [B, 128] f32         observation in lanes [OUT, OUT+N_S), else 0
    u_ref,       # VMEM [B, 128] f32         host uniform draw in [0,1)
    base_ref,    # VMEM [8, 128] f32         p1 | diff | - | keep_x | lp_hot | lp_bias | 0 | 0
    w_ref,       # VMEM [2, 128, 128] bf16   this layer's W1cat and W2|W3|Wo slab
    b_ref,       # VMEM [1, 8, 128] f32      this layer's b1 | b2 | b3 | bo | 0...
    out_ref,     # VMEM [B, 128] f32 out     lanes 0..OUT-1 = xs, lane OUT = log_As_probs
    xcat_scr,    # VMEM [B, 128] f32 scratch flow state + aux, persists across grid steps
    pd_scr,      # VMEM [B, 128] f32 scratch prior * (ls1 - ls0), persists across grid steps
):
    l = pl.program_id(0)

    # ---- fused prior sample (only on the first layer step) --------------------
    @pl.when(l == 0)
    def _init():
        p1 = base_ref[0:1, :]                 # Bernoulli prob of class 1 (0 beyond lane OUT-1)
        diff = base_ref[1:2, :]               # log_softmax[:,1] - log_softmax[:,0]
        prior = jnp.where(u_ref[...] < p1, 1.0, 0.0)       # exactly 0 beyond lane OUT-1
        xcat_scr[...] = prior + aux_ref[...]  # x in lanes [0,OUT), aux in [OUT,OUT+N_S)
        pd_scr[...] = prior * diff            # reduced at the last step

    xcat = xcat_scr[...]
    bp = b_ref[0]                             # [8,128] f32

    # transform_ft MLP: weight refs inlined into each dot (live range = one dot);
    # operands cast to bf16 at the MXU boundary only, accumulation in f32.
    h = jnp.tanh(jnp.dot(xcat.astype(jnp.bfloat16), w_ref[0],
                         preferred_element_type=jnp.float32) + bp[0:1, :])
    h = jnp.tanh(jnp.dot(h.astype(jnp.bfloat16), w_ref[1],
                         preferred_element_type=jnp.float32) + bp[1:2, :])
    h = jnp.tanh(jnp.dot(h.astype(jnp.bfloat16), w_ref[1],
                         preferred_element_type=jnp.float32) + bp[2:3, :])
    f = jnp.dot(h.astype(jnp.bfloat16), w_ref[1],
                preferred_element_type=jnp.float32) + bp[3:4, :]   # nonzero only at idx_b lanes

    # BinActive -> {0,1}; ScaleLayer(0.9)>0 folded away; f>0 avoids sign(0)=0.5.
    # No mask needed: f is exactly 0.0 off the idx_b lanes (zero columns + zero bias).
    f_bin = jnp.where(f > 0.0, 1.0, 0.0)

    # one_hot_add over vocab 2 == XOR, applied in place only at idx_b lanes
    xcat_scr[...] = xcat + f_bin - 2.0 * xcat * f_bin

    # ---- finalize: log-prob reduce + single lane-dense, unmasked store --------
    @pl.when(l == pl.num_programs(0) - 1)
    def _fin():
        keep_x = base_ref[3:4, :]             # 1.0 on lanes [0, OUT)
        lp_hot = base_ref[4:5, :]             # 1.0 on lane OUT only
        lp_bias = base_ref[5:6, :]            # sum(log_softmax[:,0]) on lane OUT only
        logp = jnp.sum(pd_scr[...], axis=-1, keepdims=True)        # [B, 1]
        out_ref[...] = xcat_scr[...] * keep_x + logp * lp_hot + lp_bias


# ----------------------------------------------------------------------------
# Host-side parameter init + offline folding / packing
# ----------------------------------------------------------------------------
def init_params(key):
    keys = jax.random.split(key, 1 + NLAYERS)
    base_logit_probs = jax.random.uniform(keys[0], (OUT, 2), jnp.float32)

    def lin_w(k, fan_in, fan_out):
        bound = 1.0 / math.sqrt(fan_in)
        return jax.random.uniform(k, (fan_in, fan_out), jnp.float32, -bound, bound)

    def lin_b(k, fan_in, fan_out):
        bound = 1.0 / math.sqrt(fan_in)
        return jax.random.uniform(k, (fan_out,), jnp.float32, -bound, bound)

    layers = []
    for l in range(NLAYERS):
        lk = jax.random.split(keys[1 + l], 10)
        perm = jax.random.permutation(lk[0], OUT)
        idx_a, idx_b = perm[:DA], perm[DA:]
        fan1 = DA + N_S
        layers.append(dict(
            idx_a=idx_a, idx_b=idx_b,
            W1=lin_w(lk[1], fan1, HID), b1=lin_b(lk[2], fan1, HID),
            W2=lin_w(lk[3], HID, HID), b2=lin_b(lk[4], HID, HID),
            W3=lin_w(lk[5], HID, HID), b3=lin_b(lk[6], HID, HID),
            Wo=lin_w(lk[7], HID, DB), bo=lin_b(lk[8], HID, DB),
        ))
    return base_logit_probs, layers


def pack_params(base_logit_probs, layers):
    # wpack: per layer 2 slabs -> [NLAYERS*2, 128, 128] bf16
    wpack = jnp.zeros((NLAYERS * 2, LANES, LANES), jnp.float32)
    bpack = jnp.zeros((NLAYERS, 8, LANES), jnp.float32)

    for l, p in enumerate(layers):
        idx_a, idx_b = p["idx_a"], p["idx_b"]
        w1a, w1x = p["W1"][:DA], p["W1"][DA:]

        # fold the Pa gather + aux concat into the first Linear (row-scatter)
        w1cat = jnp.zeros((LANES, LANES), jnp.float32)
        w1cat = w1cat.at[idx_a, :HID].set(w1a)
        w1cat = w1cat.at[OUT:OUT + N_S, :HID].set(w1x)

        # W2, W3 and Wo (scale + inverse_idx scatter folded) share ONE slab at
        # disjoint row/column blocks; zero lanes stay exactly zero between dots.
        slab = jnp.zeros((LANES, LANES), jnp.float32)
        slab = slab.at[:HID, H2_OFF:H2_OFF + HID].set(p["W2"])
        slab = slab.at[H2_OFF:H2_OFF + HID, H3_OFF:H3_OFF + HID].set(p["W3"])
        slab = slab.at[H3_OFF:H3_OFF + HID, idx_b].set(p["Wo"] * SCALE_VALUE)

        wpack = wpack.at[2 * l + 0].set(w1cat)
        wpack = wpack.at[2 * l + 1].set(slab)

        brow = jnp.zeros((8, LANES), jnp.float32)
        brow = brow.at[0, :HID].set(p["b1"])
        brow = brow.at[1, H2_OFF:H2_OFF + HID].set(p["b2"])
        brow = brow.at[2, H3_OFF:H3_OFF + HID].set(p["b3"])
        brow = brow.at[3, idx_b].set(p["bo"] * SCALE_VALUE)
        bpack = bpack.at[l].set(brow)

    ls = jax.nn.log_softmax(base_logit_probs, axis=-1)          # [OUT, 2]
    p1 = jax.nn.softmax(base_logit_probs, axis=-1)[:, 1]
    base = jnp.zeros((8, LANES), jnp.float32)
    base = base.at[0, :OUT].set(p1)                             # Bernoulli prob of class 1
    base = base.at[1, :OUT].set(ls[:, 1] - ls[:, 0])            # diff
    base = base.at[3, :OUT].set(1.0)                            # keep-x mask
    base = base.at[4, OUT].set(1.0)                             # logp output lane (one-hot)
    base = base.at[5, OUT].set(jnp.sum(ls[:, 0]))               # sum(ls0) folded output bias

    return {"wpack": wpack.astype(jnp.bfloat16), "bpack": bpack, "base": base}


# ----------------------------------------------------------------------------
# Wrapper
# ----------------------------------------------------------------------------
def graphflows_forward(ob, uniform, packed):
    # ob: [B, N_S] float32 observation; uniform: [B, 128] in [0,1)
    # (torch path uses batch size 1; kernel is batch-generic)
    B = ob.shape[0]
    auxcat = jnp.zeros((B, LANES), jnp.float32).at[:, OUT:OUT + N_S].set(ob.astype(jnp.float32))

    grid_spec = pltpu.PrefetchScalarGridSpec(
        num_scalar_prefetch=0,
        grid=(NLAYERS,),                                      # one step per flow layer
        in_specs=[
            pl.BlockSpec((B, LANES), lambda l: (0, 0)),       # aux (resident across steps)
            pl.BlockSpec((B, LANES), lambda l: (0, 0)),       # uniform draw
            pl.BlockSpec((8, LANES), lambda l: (0, 0)),       # base rows
            pl.BlockSpec((2, LANES, LANES), lambda l: (l, 0, 0)),  # this layer's 2 slabs
            pl.BlockSpec((1, 8, LANES), lambda l: (l, 0, 0)),      # this layer's biases
        ],
        out_specs=pl.BlockSpec((B, LANES), lambda l: (0, 0)),
        scratch_shapes=[pltpu.VMEM((B, LANES), jnp.float32),  # xcat carry
                        pltpu.VMEM((B, LANES), jnp.float32)], # prior*diff carry
    )
    out = pl.pallas_call(
        graphflows_kernel,
        out_shape=jax.ShapeDtypeStruct((B, LANES), jnp.float32),
        grid_spec=grid_spec,
    )(auxcat, uniform, packed["base"], packed["wpack"], packed["bpack"])

    xs = out[:, :OUT]                                          # [B, 25]
    log_As_probs = out[:, OUT]                                 # [B]
    As = jnp.squeeze(xs.reshape(B, N_AGENT, N_AGENT)).astype(jnp.float32)
    return As, log_As_probs


if __name__ == "__main__":
    root = jax.random.PRNGKey(0)
    k_param, k_ob, k_unif = jax.random.split(root, 3)

    base_logit_probs, layers = init_params(k_param)
    packed = pack_params(base_logit_probs, layers)

    ob = jax.random.normal(k_ob, (1, N_S), jnp.float32)        # single observation, batch=1
    uniform = jax.random.uniform(k_unif, (1, LANES), jnp.float32)

    As, log_As_probs = graphflows_forward(ob, uniform, packed)
    jax.block_until_ready((As, log_As_probs))

    assert As.shape == (N_AGENT, N_AGENT)
    assert log_As_probs.shape == (1,)
    # adjacency entries must be exact 0/1 after the binary flow
    assert bool(jnp.all((As == 0.0) | (As == 1.0)))
    print("KERNEL_OK")
</pallas_src>

<mosaic_0001>
module attributes {stable_mosaic.version = 11 : i64} {
  func.func @graphflows_kernel(%arg0: i32, %arg1: memref<1x128xf32, #tpu.memory_space<vmem>>, %arg2: memref<1x128xf32, #tpu.memory_space<vmem>>, %arg3: memref<8x128xf32, #tpu.memory_space<vmem>>, %arg4: memref<2x128x128xbf16, #tpu.memory_space<vmem>>, %arg5: memref<1x8x128xf32, #tpu.memory_space<vmem>>, %arg6: memref<1x128xf32, #tpu.memory_space<vmem>>, %arg7: memref<1x128xf32, #tpu.memory_space<vmem>>, %arg8: memref<1x128xf32, #tpu.memory_space<vmem>>) attributes {dimension_semantics = [#tpu.dimension_semantics<arbitrary>], iteration_bounds = array<i64: 3>, scalar_prefetch = 0 : i64, scratch_operands = 2 : i64, tpu.core_type = #tpu.core_type<tc>, window_params = [{pipeline_mode = #tpu.pipeline_mode<synchronous>, transform_indices = @transform_0, window_bounds = array<i64: 1, 128>}, {pipeline_mode = #tpu.pipeline_mode<synchronous>, transform_indices = @transform_1, window_bounds = array<i64: 1, 128>}, {pipeline_mode = #tpu.pipeline_mode<synchronous>, transform_indices = @transform_2, window_bounds = array<i64: 8, 128>}, {transform_indices = @transform_3, window_bounds = array<i64: 2, 128, 128>}, {transform_indices = @transform_4, window_bounds = array<i64: 1, 8, 128>}, {pipeline_mode = #tpu.pipeline_mode<synchronous>, transform_indices = @transform_5, window_bounds = array<i64: 1, 128>}]} {
    %c0_i32 = arith.constant 0 : i32
    %0 = arith.cmpi eq, %arg0, %c0_i32 : i32
    %1 = arith.extui %0 : i1 to i32
    %c0_i32_0 = arith.constant 0 : i32
    %2 = arith.cmpi ne, %1, %c0_i32_0 : i32
    scf.if %2 {
      %c0_26 = arith.constant 0 : index
      %c0_27 = arith.constant 0 : index
      %47 = vector.load %arg3[%c0_26, %c0_27] : memref<8x128xf32, #tpu.memory_space<vmem>>, vector<1x128xf32>
      %c1_28 = arith.constant 1 : index
      %c0_29 = arith.constant 0 : index
      %48 = vector.load %arg3[%c1_28, %c0_29] : memref<8x128xf32, #tpu.memory_space<vmem>>, vector<1x128xf32>
      %c0_30 = arith.constant 0 : index
      %c0_31 = arith.constant 0 : index
      %49 = vector.load %arg2[%c0_30, %c0_31] : memref<1x128xf32, #tpu.memory_space<vmem>>, vector<1x128xf32>
      %50 = arith.cmpf olt, %49, %47 : vector<1x128xf32>
      %cst_32 = arith.constant 1.000000e+00 : f32
      %cst_33 = arith.constant 0.000000e+00 : f32
      %51 = vector.broadcast %cst_32 : f32 to vector<1x128xf32>
      %52 = vector.broadcast %cst_33 : f32 to vector<1x128xf32>
      %53 = arith.select %50, %51, %52 : vector<1x128xi1>, vector<1x128xf32>
      %c0_34 = arith.constant 0 : index
      %c0_35 = arith.constant 0 : index
      %54 = vector.load %arg1[%c0_34, %c0_35] : memref<1x128xf32, #tpu.memory_space<vmem>>, vector<1x128xf32>
      %55 = arith.addf %53, %54 : vector<1x128xf32>
      %c0_36 = arith.constant 0 : index
      %c0_37 = arith.constant 0 : index
      %56 = vector.load %arg7[%c0_36, %c0_37] : memref<1x128xf32, #tpu.memory_space<vmem>>, vector<1x128xf32>
      tpu.vector_store %arg7[%c0_36, %c0_37], %55 {strides = array<i32>} : memref<1x128xf32, #tpu.memory_space<vmem>>, vector<1x128xf32>,
      %57 = arith.mulf %53, %48 : vector<1x128xf32>
      %c0_38 = arith.constant 0 : index
      %c0_39 = arith.constant 0 : index
      %58 = vector.load %arg8[%c0_38, %c0_39] : memref<1x128xf32, #tpu.memory_space<vmem>>, vector<1x128xf32>
      tpu.vector_store %arg8[%c0_38, %c0_39], %57 {strides = array<i32>} : memref<1x128xf32, #tpu.memory_space<vmem>>, vector<1x128xf32>,
    } else {
    }
    %c0 = arith.constant 0 : index
    %c0_1 = arith.constant 0 : index
    %3 = vector.load %arg7[%c0, %c0_1] : memref<1x128xf32, #tpu.memory_space<vmem>>, vector<1x128xf32>
    %c0_2 = arith.constant 0 : index
    %c0_3 = arith.constant 0 : index
    %c0_4 = arith.constant 0 : index
    %4 = vector.load %arg5[%c0_2, %c0_3, %c0_4] : memref<1x8x128xf32, #tpu.memory_space<vmem>>, vector<1x8x128xf32>
    %5 = vector.shape_cast %4 : vector<1x8x128xf32> to vector<8x128xf32>
    %6 = arith.truncf %3 : vector<1x128xf32> to vector<1x128xbf16>
    %c0_5 = arith.constant 0 : index
    %c0_6 = arith.constant 0 : index
    %c0_7 = arith.constant 0 : index
    %7 = vector.load %arg4[%c0_5, %c0_6, %c0_7] : memref<2x128x128xbf16, #tpu.memory_space<vmem>>, vector<1x128x128xbf16>
    %8 = vector.shape_cast %7 : vector<1x128x128xbf16> to vector<128x128xbf16>
    %cst = arith.constant dense<0.000000e+00> : vector<1x128xf32>
    %9 = tpu.matmul %6, %8, %cst {dimension_numbers = #tpu.dot_dimension_numbers<[1], [0], [0], [1], [0, 0, 1, 1], [], []>} : vector<1x128xbf16>, vector<128x128xbf16>, vector<1x128xf32> -> vector<1x128xf32>
    %10 = vector.extract_strided_slice %5 {offsets = [0, 0], sizes = [1, 128], strides = [1, 1]} : vector<8x128xf32> to vector<1x128xf32>
    %11 = arith.addf %9, %10 : vector<1x128xf32>
    %12 = math.tanh %11 : vector<1x128xf32>
    %13 = arith.truncf %12 : vector<1x128xf32> to vector<1x128xbf16>
    %c1 = arith.constant 1 : index
    %c0_8 = arith.constant 0 : index
    %c0_9 = arith.constant 0 : index
    %14 = vector.load %arg4[%c1, %c0_8, %c0_9] : memref<2x128x128xbf16, #tpu.memory_space<vmem>>, vector<1x128x128xbf16>
    %15 = vector.shape_cast %14 : vector<1x128x128xbf16> to vector<128x128xbf16>
    %cst_10 = arith.constant dense<0.000000e+00> : vector<1x128xf32>
    %16 = tpu.matmul %13, %15, %cst_10 {dimension_numbers = #tpu.dot_dimension_numbers<[1], [0], [0], [1], [0, 0, 1, 1], [], []>} : vector<1x128xbf16>, vector<128x128xbf16>, vector<1x128xf32> -> vector<1x128xf32>
    %17 = vector.extract_strided_slice %5 {offsets = [1, 0], sizes = [1, 128], strides = [1, 1]} : vector<8x128xf32> to vector<1x128xf32>
    %18 = arith.addf %16, %17 : vector<1x128xf32>
    %19 = math.tanh %18 : vector<1x128xf32>
    %20 = arith.truncf %19 : vector<1x128xf32> to vector<1x128xbf16>
    %c1_11 = arith.constant 1 : index
    %c0_12 = arith.constant 0 : index
    %c0_13 = arith.constant 0 : index
    %21 = vector.load %arg4[%c1_11, %c0_12, %c0_13] : memref<2x128x128xbf16, #tpu.memory_space<vmem>>, vector<1x128x128xbf16>
    %22 = vector.shape_cast %21 : vector<1x128x128xbf16> to vector<128x128xbf16>
    %cst_14 = arith.constant dense<0.000000e+00> : vector<1x128xf32>
    %23 = tpu.matmul %20, %22, %cst_14 {dimension_numbers = #tpu.dot_dimension_numbers<[1], [0], [0], [1], [0, 0, 1, 1], [], []>} : vector<1x128xbf16>, vector<128x128xbf16>, vector<1x128xf32> -> vector<1x128xf32>
    %24 = vector.extract_strided_slice %5 {offsets = [2, 0], sizes = [1, 128], strides = [1, 1]} : vector<8x128xf32> to vector<1x128xf32>
    %25 = arith.addf %23, %24 : vector<1x128xf32>
    %26 = math.tanh %25 : vector<1x128xf32>
    %27 = arith.truncf %26 : vector<1x128xf32> to vector<1x128xbf16>
    %c1_15 = arith.constant 1 : index
    %c0_16 = arith.constant 0 : index
    %c0_17 = arith.constant 0 : index
    %28 = vector.load %arg4[%c1_15, %c0_16, %c0_17] : memref<2x128x128xbf16, #tpu.memory_space<vmem>>, vector<1x128x128xbf16>
    %29 = vector.shape_cast %28 : vector<1x128x128xbf16> to vector<128x128xbf16>
    %cst_18 = arith.constant dense<0.000000e+00> : vector<1x128xf32>
    %30 = tpu.matmul %27, %29, %cst_18 {dimension_numbers = #tpu.dot_dimension_numbers<[1], [0], [0], [1], [0, 0, 1, 1], [], []>} : vector<1x128xbf16>, vector<128x128xbf16>, vector<1x128xf32> -> vector<1x128xf32>
    %31 = vector.extract_strided_slice %5 {offsets = [3, 0], sizes = [1, 128], strides = [1, 1]} : vector<8x128xf32> to vector<1x128xf32>
    %32 = arith.addf %30, %31 : vector<1x128xf32>
    %cst_19 = arith.constant 0.000000e+00 : f32
    %33 = vector.broadcast %cst_19 : f32 to vector<1x128xf32>
    %34 = arith.cmpf ogt, %32, %33 : vector<1x128xf32>
    %cst_20 = arith.constant 1.000000e+00 : f32
    %cst_21 = arith.constant 0.000000e+00 : f32
    %35 = vector.broadcast %cst_20 : f32 to vector<1x128xf32>
    %36 = vector.broadcast %cst_21 : f32 to vector<1x128xf32>
    %37 = arith.select %34, %35, %36 : vector<1x128xi1>, vector<1x128xf32>
    %38 = arith.addf %3, %37 : vector<1x128xf32>
    %cst_22 = arith.constant 2.000000e+00 : f32
    %39 = vector.broadcast %cst_22 : f32 to vector<1x128xf32>
    %40 = arith.mulf %39, %3 : vector<1x128xf32>
    %41 = arith.mulf %40, %37 : vector<1x128xf32>
    %42 = arith.subf %38, %41 : vector<1x128xf32>
    %c0_23 = arith.constant 0 : index
    %c0_24 = arith.constant 0 : index
    %43 = vector.load %arg7[%c0_23, %c0_24] : memref<1x128xf32, #tpu.memory_space<vmem>>, vector<1x128xf32>
    tpu.vector_store %arg7[%c0_23, %c0_24], %42 {strides = array<i32>} : memref<1x128xf32, #tpu.memory_space<vmem>>, vector<1x128xf32>,
    %c2_i32 = arith.constant 2 : i32
    %44 = arith.cmpi eq, %arg0, %c2_i32 : i32
    %45 = arith.extui %44 : i1 to i32
    %c0_i32_25 = arith.constant 0 : i32
    %46 = arith.cmpi ne, %45, %c0_i32_25 : i32
    scf.if %46 {
      %c3 = arith.constant 3 : index
      %c0_26 = arith.constant 0 : index
      %47 = vector.load %arg3[%c3, %c0_26] : memref<8x128xf32, #tpu.memory_space<vmem>>, vector<1x128xf32>
      %c4 = arith.constant 4 : index
      %c0_27 = arith.constant 0 : index
      %48 = vector.load %arg3[%c4, %c0_27] : memref<8x128xf32, #tpu.memory_space<vmem>>, vector<1x128xf32>
      %c5 = arith.constant 5 : index
      %c0_28 = arith.constant 0 : index
      %49 = vector.load %arg3[%c5, %c0_28] : memref<8x128xf32, #tpu.memory_space<vmem>>, vector<1x128xf32>
      %c0_29 = arith.constant 0 : index
      %c0_30 = arith.constant 0 : index
      %50 = vector.load %arg8[%c0_29, %c0_30] : memref<1x128xf32, #tpu.memory_space<vmem>>, vector<1x128xf32>
      %cst_31 = arith.constant dense<0.000000e+00> : vector<1xf32>
      %51 = vector.multi_reduction <add>, %50, %cst_31 [1] : vector<1x128xf32> to vector<1xf32>
      %52 = vector.shape_cast %51 : vector<1xf32> to vector<1x1xf32>
      %c0_32 = arith.constant 0 : index
      %c0_33 = arith.constant 0 : index
      %53 = vector.load %arg7[%c0_32, %c0_33] : memref<1x128xf32, #tpu.memory_space<vmem>>, vector<1x128xf32>
      %54 = arith.mulf %53, %47 : vector<1x128xf32>
      %55 = vector.broadcast %52 : vector<1x1xf32> to vector<1x128xf32>
      %56 = arith.mulf %55, %48 : vector<1x128xf32>
      %57 = arith.addf %54, %56 : vector<1x128xf32>
      %58 = arith.addf %57, %49 : vector<1x128xf32>
      %c0_34 = arith.constant 0 : index
      %c0_35 = arith.constant 0 : index
      %59 = vector.load %arg6[%c0_34, %c0_35] : memref<1x128xf32, #tpu.memory_space<vmem>>, vector<1x128xf32>
      tpu.vector_store %arg6[%c0_34, %c0_35], %58 {strides = array<i32>} : memref<1x128xf32, #tpu.memory_space<vmem>>, vector<1x128xf32>,
    } else {
    }
    return
  }
  func.func @transform_0(%arg0: i32) -> (i32, i32) {
    %c0_i32 = arith.constant 0 : i32
    %c0_i32_0 = arith.constant 0 : i32
    %c0_i32_1 = arith.constant 0 : i32
    return %c0_i32, %c0_i32_0 : i32, i32
  }
  func.func @transform_1(%arg0: i32) -> (i32, i32) {
    %c0_i32 = arith.constant 0 : i32
    %c0_i32_0 = arith.constant 0 : i32
    %c0_i32_1 = arith.constant 0 : i32
    return %c0_i32, %c0_i32_0 : i32, i32
  }
  func.func @transform_2(%arg0: i32) -> (i32, i32) {
    %c0_i32 = arith.constant 0 : i32
    %c0_i32_0 = arith.constant 0 : i32
    %c0_i32_1 = arith.constant 0 : i32
    return %c0_i32, %c0_i32_0 : i32, i32
  }
  func.func @transform_3(%arg0: i32) -> (i32, i32, i32) {
    %c0_i32 = arith.constant 0 : i32
    %c0_i32_0 = arith.constant 0 : i32
    %c0_i32_1 = arith.constant 0 : i32
    return %arg0, %c0_i32, %c0_i32_0 : i32, i32, i32
  }
  func.func @transform_4(%arg0: i32) -> (i32, i32, i32) {
    %c0_i32 = arith.constant 0 : i32
    %c0_i32_0 = arith.constant 0 : i32
    %c0_i32_1 = arith.constant 0 : i32
    return %arg0, %c0_i32, %c0_i32_0 : i32, i32, i32
  }
  func.func @transform_5(%arg0: i32) -> (i32, i32) {
    %c0_i32 = arith.constant 0 : i32
    %c0_i32_0 = arith.constant 0 : i32
    %c0_i32_1 = arith.constant 0 : i32
    return %c0_i32, %c0_i32_0 : i32, i32
  }
}

</mosaic_0001>

<llo_original>
// kernel: tpu_custom_call.1
$region0: #{tpu_custom_call.1}
  #allocation0 [shape = 'u32[]', space=smem, size = 0x4, offset = 0x4, fixed_abs, tag = 'smem constant byte address 0x4 - core index']
  #allocation1 [shape = 'u32[144,128]{1,0:T(1,128)}', space=vmem, size = 0x12000, scoped, tag = 'internal scratch']
  #allocation2 [shape = 'f32[1,128]{1,0:T(1,128)}', space=vmem, size = 0x200, scoped, tag = 'scratch operand']
  #allocation3 [shape = 'f32[1,128]{1,0:T(1,128)}', space=vmem, size = 0x200, scoped, tag = 'scratch operand']
  %s0 = inlined_call_operand.hbm [shape: f32[1,128], index: 0, kind: input, shape index: {}]
  %s1 = inlined_call_operand.vmem [shape: f32[1,128], index: 1, kind: input, shape index: {}]
  %s2 = inlined_call_operand.hbm [shape: f32[8,128], index: 2, kind: input, shape index: {}]
  %s3 = inlined_call_operand.hbm [shape: bf16[6,128,128], index: 3, kind: input, shape index: {}]
  %s4 = inlined_call_operand.hbm [shape: f32[3,8,128], index: 4, kind: input, shape index: {}]
  %s5 = inlined_call_operand.hbm [shape: f32[1,128], index: 5, kind: output, shape index: {}]
  %s6 = sld [smem:[#allocation0]]
  $region77: #{tpu_custom_call.1} parent=0
    _
  %s8 = ssub.s32 1, %s6
  %s9 = scalar_select 0, %s8, %s6
  $region1: #{tpu_custom_call.1} parent=0
    #allocation4 [shape = 'u8[512]{0}', space=vmem, size = 0x400, scoped, tag = 'input window, operand 0, single buffered']
    #allocation5 [shape = 's32[2]{0}', space=sflag, size = 0x8, scoped, tag = 'scoped memory for tpu_custom_call.1']
    #allocation6 [shape = 's32[2]{0}', space=sflag, size = 0x8, scoped, tag = 'scoped memory for tpu_custom_call.1']
    #allocation7 [shape = 'u8[4096]{0}', space=vmem, size = 0x1000, scoped, tag = 'input window, operand 2, single buffered']
    #allocation8 [shape = 's32[1]{0}', space=sflag, size = 0x4, scoped, tag = 'scoped memory for tpu_custom_call.1']
    #allocation9 [shape = 'u8[131072]{0}', space=vmem, size = 0x20000, scoped, tag = 'input window, operand 3']
    #allocation10 [shape = 'u8[8192]{0}', space=vmem, size = 0x2000, scoped, tag = 'input window, operand 4']
    #allocation11 [shape = 'u8[512]{0}', space=vmem, size = 0x400, scoped, tag = 'output window, operand 0, single buffered']
    %10 = vsyncpa [#allocation5], 0
    %11 = vsyncpa [#allocation8], 0
    %12 = vsyncpa [#allocation6], 0
    loop: start=0, step=1, limit=5
    $region2: #{tpu_custom_call.1} parent=1 // loop_pre_header
      _
    $region3: #{tpu_custom_call.1} parent=1 // loop_header
      %s14 = sphi 0, %s18
      %p15 = scmp.ge.s32.totalorder %s14, 5
      %s22 = sphi 0, %s22
      %s24 = sphi 0, %s22
      %s25 = sphi 0, %s24
      %s39 = sphi 0, %s25
      %s43 = sphi 0, %s43
      %s45 = sphi 0, %s43
      %s46 = sphi 0, %s45
      %s60 = sphi 0, %s46
      %s64 = sphi 0, %s64
      %s66 = sphi 0, %s64
      %s67 = sphi 0, %s66
      %s81 = sphi 0, %s67
      %s87 = sphi 0, %s89
      %s90 = sphi 0, %s87
      %s91 = sphi 0, %s90
      %s107 = sphi 0, %s91
      %s113 = sphi 0, %s115
      %s116 = sphi 0, %s113
      %s117 = sphi 0, %s116
      %s133 = sphi 0, %s117
      %s137 = sphi 0, %s137
      %s139 = sphi 0, %s137
      %s140 = sphi 0, %s139
      %s154 = sphi 0, %s140
    $region4: #{tpu_custom_call.1} parent=1 // loop_header_branch
      %17 = sbr.rel (%p15) target = $region8
    $region5: #{tpu_custom_call.1} parent=1 // loop_body
      %s19 = ssub.s32 %s14, 1
      %s20 = ssub.s32 %s14, 2
      %s21 = sadd.s32 %s14, 1
      %s23 = sadd.s32 %s22, 1
      %p26 = scmp.eq.s32.totalorder %s14, 2
      %p27 = scmp.ne.s32.totalorder %s22, %s24
      %p28 = scmp.eq.s32.totalorder %s14, 0
      %p29 = por %p27, %p28
      %p30 = scmp.ne.s32.totalorder %s22, %s24
      %p31 = scmp.eq.s32.totalorder %s19, 2
      %p32 = por %p30, %p31
      %p33 = scmp.ne.s32.totalorder %s24, %s25
      %p34 = scmp.eq.s32.totalorder %s19, 0
      %p35 = por %p33, %p34
      %p36 = scmp.ne.s32.totalorder %s24, %s25
      %p37 = scmp.eq.s32.totalorder %s20, 2
      %p38 = por %p36, %p37
      %p40 = scmp.ne.s32.totalorder %s25, %s39
      %p41 = scmp.eq.s32.totalorder %s20, 0
      %p42 = por %p40, %p41
      %s44 = sadd.s32 %s43, 1
      %p47 = scmp.eq.s32.totalorder %s14, 2
      %p48 = scmp.ne.s32.totalorder %s43, %s45
      %p49 = scmp.eq.s32.totalorder %s14, 0
      %p50 = por %p48, %p49
      %p51 = scmp.ne.s32.totalorder %s43, %s45
      %p52 = scmp.eq.s32.totalorder %s19, 2
      %p53 = por %p51, %p52
      %p54 = scmp.ne.s32.totalorder %s45, %s46
      %p55 = scmp.eq.s32.totalorder %s19, 0
      %p56 = por %p54, %p55
      %p57 = scmp.ne.s32.totalorder %s45, %s46
      %p58 = scmp.eq.s32.totalorder %s20, 2
      %p59 = por %p57, %p58
      %p61 = scmp.ne.s32.totalorder %s46, %s60
      %p62 = scmp.eq.s32.totalorder %s20, 0
      %p63 = por %p61, %p62
      %s65 = sadd.s32 %s64, 1
      %p68 = scmp.eq.s32.totalorder %s14, 2
      %p69 = scmp.ne.s32.totalorder %s64, %s66
      %p70 = scmp.eq.s32.totalorder %s14, 0
      %p71 = por %p69, %p70
      %p72 = scmp.ne.s32.totalorder %s64, %s66
      %p73 = scmp.eq.s32.totalorder %s19, 2
      %p74 = por %p72, %p73
      %p75 = scmp.ne.s32.totalorder %s66, %s67
      %p76 = scmp.eq.s32.totalorder %s19, 0
      %p77 = por %p75, %p76
      %p78 = scmp.ne.s32.totalorder %s66, %s67
      %p79 = scmp.eq.s32.totalorder %s20, 2
      %p80 = por %p78, %p79
      %p82 = scmp.ne.s32.totalorder %s67, %s81
      %p83 = scmp.eq.s32.totalorder %s20, 0
      %p84 = por %p82, %p83
      %s85 = ssub.s32 %s14, %s21
      %p86 = scmp.eq.s32.totalorder %s85, 0
      %s88 = sadd.s32 %s87, 1
      %s89 = scalar_select %p86, %s87, %s88
      %p92 = pneg %p86
      %p93 = scmp.eq.s32.totalorder %s14, 2
      %p94 = por %p92, %p93
      %p95 = scmp.ne.s32.totalorder %s87, %s90
      %p96 = scmp.eq.s32.totalorder %s14, 0
      %p97 = por %p95, %p96
      %p98 = scmp.ne.s32.totalorder %s87, %s90
      %p99 = scmp.eq.s32.totalorder %s19, 2
      %p100 = por %p98, %p99
      %p101 = scmp.ne.s32.totalorder %s90, %s91
      %p102 = scmp.eq.s32.totalorder %s19, 0
      %p103 = por %p101, %p102
      %p104 = scmp.ne.s32.totalorder %s90, %s91
      %p105 = scmp.eq.s32.totalorder %s20, 2
      %p106 = por %p104, %p105
      %p108 = scmp.ne.s32.totalorder %s91, %s107
      %p109 = scmp.eq.s32.totalorder %s20, 0
      %p110 = por %p108, %p109
      %s111 = ssub.s32 %s14, %s21
      %p112 = scmp.eq.s32.totalorder %s111, 0
      %s114 = sadd.s32 %s113, 1
      %s115 = scalar_select %p112, %s113, %s114
      %p118 = pneg %p112
      %p119 = scmp.eq.s32.totalorder %s14, 2
      %p120 = por %p118, %p119
      %p121 = scmp.ne.s32.totalorder %s113, %s116
      %p122 = scmp.eq.s32.totalorder %s14, 0
      %p123 = por %p121, %p122
      %p124 = scmp.ne.s32.totalorder %s113, %s116
      %p125 = scmp.eq.s32.totalorder %s19, 2
      %p126 = por %p124, %p125
      %p127 = scmp.ne.s32.totalorder %s116, %s117
      %p128 = scmp.eq.s32.totalorder %s19, 0
      %p129 = por %p127, %p128
      %p130 = scmp.ne.s32.totalorder %s116, %s117
      %p131 = scmp.eq.s32.totalorder %s20, 2
      %p132 = por %p130, %p131
      %p134 = scmp.ne.s32.totalorder %s117, %s133
      %p135 = scmp.eq.s32.totalorder %s20, 0
      %p136 = por %p134, %p135
      %s138 = sadd.s32 %s137, 1
      %p141 = scmp.eq.s32.totalorder %s14, 2
      %p142 = scmp.ne.s32.totalorder %s137, %s139
      %p143 = scmp.eq.s32.totalorder %s14, 0
      %p144 = por %p142, %p143
      %p145 = scmp.ne.s32.totalorder %s137, %s139
      %p146 = scmp.eq.s32.totalorder %s19, 2
      %p147 = por %p145, %p146
      %p148 = scmp.ne.s32.totalorder %s139, %s140
      %p149 = scmp.eq.s32.totalorder %s19, 0
      %p150 = por %p148, %p149
      %p151 = scmp.ne.s32.totalorder %s139, %s140
      %p152 = scmp.eq.s32.totalorder %s20, 2
      %p153 = por %p151, %p152
      %p155 = scmp.ne.s32.totalorder %s140, %s154
      %p156 = scmp.eq.s32.totalorder %s20, 0
      %p157 = por %p155, %p156
      %p158 = scmp.le.s32.totalorder 1, %s14
      %p159 = scmp.lt.s32.totalorder %s14, 4
      %p160 = pnand %p158, %p159
      %p161 = pneg %p160
      // Predicated region
      $region9: #{tpu_custom_call.1} parent=5 // pred_check
        _
      $region10: #{tpu_custom_call.1} parent=5 // pred_check_branch
        %163 = sbr.rel (%p160) target = $region12
      $region11: #{tpu_custom_call.1} parent=5 // pred_region
        %s164 = ssub.s32 %s14, 1
        // Predicated region
        $region13: #{tpu_custom_call.1} parent=11 // pred_check
          %p165 = pneg %p35
        $region14: #{tpu_custom_call.1} parent=11 // pred_check_branch
          %167 = sbr.rel (%p165) target = $region16
        $region15: #{tpu_custom_call.1} parent=11 // pred_region
          %s169 = ssub.s32 16, 16
          %170 = vsyncadd [#allocation5], %s169
          %s172 = sshll.u32 [#allocation4], 4
          %s173 = int_to_ptr.vmem [resolvable:$true] %s172
          %175 = dma.hbm_to_vmem [thread:$0]  %s0, 16, %s173, [#allocation5]
        $region16: #{tpu_custom_call.1} parent=11 // pred_fallthru
          _
        // Predicated region
        $region17: #{tpu_custom_call.1} parent=11 // pred_check
          %p176 = pneg %p56
        $region18: #{tpu_custom_call.1} parent=11 // pred_check_branch
          %178 = sbr.rel (%p176) target = $region20
        $region19: #{tpu_custom_call.1} parent=11 // pred_region
          _
        $region20: #{tpu_custom_call.1} parent=11 // pred_fallthru
          _
        // Predicated region
        $region21: #{tpu_custom_call.1} parent=11 // pred_check
          %p179 = pneg %p77
        $region22: #{tpu_custom_call.1} parent=11 // pred_check_branch
          %181 = sbr.rel (%p179) target = $region24
        $region23: #{tpu_custom_call.1} parent=11 // pred_region
          %s183 = ssub.s32 128, 128
          %184 = vsyncadd [#allocation8], %s183
          %s186 = sshll.u32 [#allocation7], 4
          %s187 = int_to_ptr.vmem [resolvable:$true] %s186
          %189 = dma.hbm_to_vmem [thread:$0]  %s2, 128, %s187, [#allocation8]
        $region24: #{tpu_custom_call.1} parent=11 // pred_fallthru
          _
      $region12: #{tpu_custom_call.1} parent=5 // pred_fallthru
        _
      %p190 = scmp.lt.s32.totalorder %s14, 3
      // Predicated region
      $region25: #{tpu_custom_call.1} parent=5 // pred_check
        %p191 = pneg %p190
      $region26: #{tpu_custom_call.1} parent=5 // pred_check_branch
        %193 = sbr.rel (%p191) target = $region28
      $region27: #{tpu_custom_call.1} parent=5 // pred_region
        // Predicated region
        $region29: #{tpu_custom_call.1} parent=27 // pred_check
          %p194 = pneg %p97
        $region30: #{tpu_custom_call.1} parent=27 // pred_check_branch
          %196 = sbr.rel (%p194) target = $region32
        $region31: #{tpu_custom_call.1} parent=27 // pred_region
          %s197 = sand.u32 %s14, 1
          %s198 = scalar_lea.sflag [#allocation5], %s197
          %s199 = sand.u32 %s87, 1
          %s200 = smul.addr %s199, 128
          %s201 = scalar_lea.vmem [#allocation9], %s200
          %s202 = smul.u32 2, %s14
          %s204 = ssub.s32 2048, 2048
          %205 = vsyncadd %s198, %s204
          %s206 = smul.addr %s202, 16
          %s207 = smul.addr %s206, 64
          %s208 = scalar_lea.hbm %s3, %s207
          %s209 = sshll.u32 %s201, 4
          %s210 = int_to_ptr.vmem [resolvable:$true] %s209
          %215 = dma.hbm_to_vmem [thread:$0]  %s208, 2048, %s210, %s198, 64, 64, 4
        $region32: #{tpu_custom_call.1} parent=27 // pred_fallthru
          _
        // Predicated region
        $region33: #{tpu_custom_call.1} parent=27 // pred_check
          %p216 = pneg %p123
        $region34: #{tpu_custom_call.1} parent=27 // pred_check_branch
          %218 = sbr.rel (%p216) target = $region36
        $region35: #{tpu_custom_call.1} parent=27 // pred_region
          %s219 = sand.u32 %s14, 1
          %s220 = scalar_lea.sflag [#allocation5], %s219
          %s221 = sand.u32 %s113, 1
          %s222 = smul.addr %s221, 8
          %s223 = scalar_lea.vmem [#allocation10], %s222
          %s225 = ssub.s32 128, 128
          %226 = vsyncadd %s220, %s225
          %s227 = smul.addr %s14, 128
          %s228 = scalar_lea.hbm %s4, %s227
          %s230 = sshll.u32 %s223, 4
          %s231 = int_to_ptr.vmem [resolvable:$true] %s230
          %233 = dma.hbm_to_vmem [thread:$0]  %s228, 128, %s231, %s220
        $region36: #{tpu_custom_call.1} parent=27 // pred_fallthru
          _
      $region28: #{tpu_custom_call.1} parent=5 // pred_fallthru
        _
      %p234 = scmp.le.s32.totalorder 1, %s14
      %p235 = scmp.lt.s32.totalorder %s14, 4
      %p236 = pnand %p234, %p235
      %p237 = pneg %p236
      // Predicated region
      $region37: #{tpu_custom_call.1} parent=5 // pred_check
        _
      $region38: #{tpu_custom_call.1} parent=5 // pred_check_branch
        %239 = sbr.rel (%p236) target = $region40
      $region39: #{tpu_custom_call.1} parent=5 // pred_region
        %s240 = ssub.s32 %s14, 1
        // Predicated region
        $region41: #{tpu_custom_call.1} parent=39 // pred_check
          %p241 = pneg %p35
        $region42: #{tpu_custom_call.1} parent=39 // pred_check_branch
          %243 = sbr.rel (%p241) target = $region44
        $region43: #{tpu_custom_call.1} parent=39 // pred_region
          %244 = dma.done [#allocation5], 16
        $region44: #{tpu_custom_call.1} parent=39 // pred_fallthru
          _
        // Predicated region
        $region45: #{tpu_custom_call.1} parent=39 // pred_check
          %p245 = pneg %p77
        $region46: #{tpu_custom_call.1} parent=39 // pred_check_branch
          %247 = sbr.rel (%p245) target = $region48
        $region47: #{tpu_custom_call.1} parent=39 // pred_region
          %248 = dma.done [#allocation8], 128
        $region48: #{tpu_custom_call.1} parent=39 // pred_fallthru
          _
        %s249 = sand.u32 %s19, 1
        %s250 = scalar_lea.sflag [#allocation5], %s249
        %s251 = sand.u32 %s90, 1
        %s252 = smul.addr %s251, 128
        %s253 = scalar_lea.vmem [#allocation9], %s252
        // Predicated region
        $region49: #{tpu_custom_call.1} parent=39 // pred_check
          %p254 = pneg %p103
        $region50: #{tpu_custom_call.1} parent=39 // pred_check_branch
          %256 = sbr.rel (%p254) target = $region52
        $region51: #{tpu_custom_call.1} parent=39 // pred_region
          %257 = dma.done %s250, 2048
        $region52: #{tpu_custom_call.1} parent=39 // pred_fallthru
          _
        %s258 = sand.u32 %s19, 1
        %s259 = scalar_lea.sflag [#allocation5], %s258
        %s260 = sand.u32 %s116, 1
        %s261 = smul.addr %s260, 8
        %s262 = scalar_lea.vmem [#allocation10], %s261
        // Predicated region
        $region53: #{tpu_custom_call.1} parent=39 // pred_check
          %p263 = pneg %p129
        $region54: #{tpu_custom_call.1} parent=39 // pred_check_branch
          %265 = sbr.rel (%p263) target = $region56
        $region55: #{tpu_custom_call.1} parent=39 // pred_region
          %266 = dma.done %s259, 128
        $region56: #{tpu_custom_call.1} parent=39 // pred_fallthru
          _
        %p267 = pneg %p35
        %p268 = pneg %p32
        %p269 = pneg %p56
        %p270 = pneg %p53
        %p271 = pneg %p77
        %p272 = pneg %p74
        %s273 = sand.u32 %s19, 1
        %s274 = scalar_lea.sflag [#allocation5], %s273
        %s275 = sand.u32 %s90, 1
        %s276 = smul.addr %s275, 128
        %s277 = scalar_lea.vmem [#allocation9], %s276
        %p278 = pneg %p103
        %p279 = pneg %p100
        %s280 = sand.u32 %s19, 1
        %s281 = scalar_lea.sflag [#allocation5], %s280
        %s282 = sand.u32 %s116, 1
        %s283 = smul.addr %s282, 8
        %s284 = scalar_lea.vmem [#allocation10], %s283
        %p285 = pneg %p129
        %p286 = pneg %p126
        %p287 = pneg %p150
        %p288 = pneg %p147
        %s289 = smul.u32 2, %s19
        %p291 = scmp.eq.s32.totalorder %s19, 0
        // Predicated region
        $region57: #{tpu_custom_call.1} parent=39 // pred_check
          %p292 = pneg %p291
        $region58: #{tpu_custom_call.1} parent=39 // pred_check_branch
          %294 = sbr.rel (%p292) target = $region60
        $region59: #{tpu_custom_call.1} parent=39 // pred_region
          %v295 = vld [vmem:[#allocation7] sm:$0x1]
          %v296 = vld [vmem:[#allocation7 + $0x1] sm:$0x1]
          %v297 = vld [vmem:[%s1] sm:$0x1]
          %vm298 = vcmp.lt.f32.partialorder %v297, %v295
          %v299 = vsel %vm298, 1.0, 0.0
          %v300 = vld [vmem:[#allocation4] sm:$0x1]
          %v301 = vadd.f32 %v299, %v300
          %302 = vst [vmem:[#allocation2] sm:$0x1] %v301
          %v303 = vmul.f32 %v299, %v296
          %304 = vst [vmem:[#allocation3] sm:$0x1] %v303
        $region60: #{tpu_custom_call.1} parent=39 // pred_fallthru
          _
        %v305 = vld [vmem:[#allocation2] sm:$0x1]
        %v306 = vld [vmem:[%s262] sm:$0xff]
        %v307 = vpack.c.bf16 %v305, %v305
        %v308 = vld [vmem:[%s253] sm:$0xf]
        %v309 = vld [vmem:[%s253 + $0x4] sm:$0xf]
        %v310 = vld [vmem:[%s253 + $0x8] sm:$0xf]
        %v311 = vld [vmem:[%s253 + $0xc] sm:$0xf]
        %v312 = vld [vmem:[%s253 + $0x10] sm:$0xf]
        %v313 = vld [vmem:[%s253 + $0x14] sm:$0xf]
        %v314 = vld [vmem:[%s253 + $0x18] sm:$0xf]
        %v315 = vld [vmem:[%s253 + $0x1c] sm:$0xf]
        %v316 = vld [vmem:[%s253 + $0x20] sm:$0xf]
        %v317 = vld [vmem:[%s253 + $0x24] sm:$0xf]
        %v318 = vld [vmem:[%s253 + $0x28] sm:$0xf]
        %v319 = vld [vmem:[%s253 + $0x2c] sm:$0xf]
        %v320 = vld [vmem:[%s253 + $0x30] sm:$0xf]
        %v321 = vld [vmem:[%s253 + $0x34] sm:$0xf]
        %v322 = vld [vmem:[%s253 + $0x38] sm:$0xf]
        %v323 = vld [vmem:[%s253 + $0x3c] sm:$0xf]
        %v340 = vunpack.c.l.b16 %v308
        %v341 = vunpack.c.l.b16 %v309
        %v342 = vunpack.c.l.b16 %v310
        %v343 = vunpack.c.l.b16 %v311
        %v344 = vunpack.c.l.b16 %v312
        %v345 = vunpack.c.l.b16 %v313
        %v346 = vunpack.c.l.b16 %v314
        %v347 = vunpack.c.l.b16 %v315
        %v348 = vunpack.c.l.b16 %v316
        %v349 = vunpack.c.l.b16 %v317
        %v350 = vunpack.c.l.b16 %v318
        %v351 = vunpack.c.l.b16 %v319
        %v352 = vunpack.c.l.b16 %v320
        %v353 = vunpack.c.l.b16 %v321
        %v354 = vunpack.c.l.b16 %v322
        %v355 = vunpack.c.l.b16 %v323
        %v356 = vpack.c.b16 %v341, %v340
        %v357 = vpack.c.b16 %v343, %v342
        %v358 = vpack.c.b16 %v345, %v344
        %v359 = vpack.c.b16 %v347, %v346
        %v360 = vpack.c.b16 %v349, %v348
        %v361 = vpack.c.b16 %v351, %v350
        %v362 = vpack.c.b16 %v353, %v352
        %v363 = vpack.c.b16 %v355, %v354
        %372 = vmatprep.subr.bf16.mxu0 0
        %373 = vmatpush1.bf16.msra.mxu0 %v356
        %374 = vmatprep.subr.bf16.mxu0 0
        %375 = vmatpush1.bf16.msra.mxu0 %v357
        %376 = vmatprep.subr.bf16.mxu0 0
        %377 = vmatpush1.bf16.msra.mxu0 %v358
        %378 = vmatprep.subr.bf16.mxu0 0
        %379 = vmatpush1.bf16.msra.mxu0 %v359
        %380 = vmatprep.subr.bf16.mxu0 0
        %381 = vmatpush1.bf16.msra.mxu0 %v360
        %382 = vmatprep.subr.bf16.mxu0 0
        %383 = vmatpush1.bf16.msra.mxu0 %v361
        %384 = vmatprep.subr.bf16.mxu0 0
        %385 = vmatpush1.bf16.msra.mxu0 %v362
        %386 = vmatprep.subr.bf16.mxu0 0
        %387 = vmatpush1.bf16.msra.mxu0 %v363
        %388 = vmatprep.subr.bf16.mxu0 0
        %389 = vmatpush1.bf16.msra.mxu0 0
        %390 = vmatprep.subr.bf16.mxu0 0
        %391 = vmatpush1.bf16.msra.mxu0 0
        %392 = vmatprep.subr.bf16.mxu0 0
        %393 = vmatpush1.bf16.msra.mxu0 0
        %394 = vmatprep.subr.bf16.mxu0 0
        %395 = vmatpush1.bf16.msra.mxu0 0
        %396 = vmatprep.subr.bf16.mxu0 0
        %397 = vmatpush1.bf16.msra.mxu0 0
        %398 = vmatprep.subr.bf16.mxu0 0
        %399 = vmatpush1.bf16.msra.mxu0 0
        %400 = vmatprep.subr.bf16.mxu0 0
        %401 = vmatpush1.bf16.msra.mxu0 0
        %402 = vmatprep.subr.bf16.mxu0 0
        %403 = vmatpush1.bf16.msra.mxu0 0
        %404 = vmatprep.mubr.bf16.mxu0 0
        %405 = vmatmul.mubr.bf16.gmra.mrb[0].mxu0 %v307
        %v406 = vpop.f32.mrb[0].mxu0
        %v407 = vadd.f32 %v306, %v406
        %v408 = vpop.f32.mrb[0].mxu0
        %v409 = vpop.f32.mrb[0].mxu0
        %v410 = vpop.f32.mrb[0].mxu0
        %411 = vdwg.mxu0
        %v412 = vtanh.pop %v407
        %v413 = vpack.c.bf16 %v412, %v412
        %s414 = scalar_lea.vmem %s253, 64 [#allocation9]
        %v415 = vld [vmem:[%s414] sm:$0xf]
        %v416 = vld [vmem:[%s414 + $0x4] sm:$0xf]
        %v417 = vld [vmem:[%s414 + $0x8] sm:$0xf]
        %v418 = vld [vmem:[%s414 + $0xc] sm:$0xf]
        %v419 = vld [vmem:[%s414 + $0x10] sm:$0xf]
        %v420 = vld [vmem:[%s414 + $0x14] sm:$0xf]
        %v421 = vld [vmem:[%s414 + $0x18] sm:$0xf]
        %v422 = vld [vmem:[%s414 + $0x1c] sm:$0xf]
        %v423 = vld [vmem:[%s414 + $0x20] sm:$0xf]
        %v424 = vld [vmem:[%s414 + $0x24] sm:$0xf]
        %v425 = vld [vmem:[%s414 + $0x28] sm:$0xf]
        %v426 = vld [vmem:[%s414 + $0x2c] sm:$0xf]
        %v427 = vld [vmem:[%s414 + $0x30] sm:$0xf]
        %v428 = vld [vmem:[%s414 + $0x34] sm:$0xf]
        %v429 = vld [vmem:[%s414 + $0x38] sm:$0xf]
        %v430 = vld [vmem:[%s414 + $0x3c] sm:$0xf]
        %v447 = vunpack.c.l.b16 %v415
        %v448 = vunpack.c.l.b16 %v416
        %v449 = vunpack.c.l.b16 %v417
        %v450 = vunpack.c.l.b16 %v418
        %v451 = vunpack.c.l.b16 %v419
        %v452 = vunpack.c.l.b16 %v420
        %v453 = vunpack.c.l.b16 %v421
        %v454 = vunpack.c.l.b16 %v422
        %v455 = vunpack.c.l.b16 %v423
        %v456 = vunpack.c.l.b16 %v424
        %v457 = vunpack.c.l.b16 %v425
        %v458 = vunpack.c.l.b16 %v426
        %v459 = vunpack.c.l.b16 %v427
        %v460 = vunpack.c.l.b16 %v428
        %v461 = vunpack.c.l.b16 %v429
        %v462 = vunpack.c.l.b16 %v430
        %v463 = vpack.c.b16 %v448, %v447
        %v464 = vpack.c.b16 %v450, %v449
        %v465 = vpack.c.b16 %v452, %v451
        %v466 = vpack.c.b16 %v454, %v453
        %v467 = vpack.c.b16 %v456, %v455
        %v468 = vpack.c.b16 %v458, %v457
        %v469 = vpack.c.b16 %v460, %v459
        %v470 = vpack.c.b16 %v462, %v461
        %v480 = vrot.slane %v306, 1
        %482 = vmatprep.subr.bf16.mxu0 0
        %483 = vmatpush1.bf16.msra.mxu0 %v463
        %484 = vmatprep.subr.bf16.mxu0 0
        %485 = vmatpush1.bf16.msra.mxu0 %v464
        %486 = vmatprep.subr.bf16.mxu0 0
        %487 = vmatpush1.bf16.msra.mxu0 %v465
        %488 = vmatprep.subr.bf16.mxu0 0
        %489 = vmatpush1.bf16.msra.mxu0 %v466
        %490 = vmatprep.subr.bf16.mxu0 0
        %491 = vmatpush1.bf16.msra.mxu0 %v467
        %492 = vmatprep.subr.bf16.mxu0 0
        %493 = vmatpush1.bf16.msra.mxu0 %v468
        %494 = vmatprep.subr.bf16.mxu0 0
        %495 = vmatpush1.bf16.msra.mxu0 %v469
        %496 = vmatprep.subr.bf16.mxu0 0
        %497 = vmatpush1.bf16.msra.mxu0 %v470
        %498 = vmatprep.subr.bf16.mxu0 0
        %499 = vmatpush1.bf16.msra.mxu0 0
        %500 = vmatprep.subr.bf16.mxu0 0
        %501 = vmatpush1.bf16.msra.mxu0 0
        %502 = vmatprep.subr.bf16.mxu0 0
        %503 = vmatpush1.bf16.msra.mxu0 0
        %504 = vmatprep.subr.bf16.mxu0 0
        %505 = vmatpush1.bf16.msra.mxu0 0
        %506 = vmatprep.subr.bf16.mxu0 0
        %507 = vmatpush1.bf16.msra.mxu0 0
        %508 = vmatprep.subr.bf16.mxu0 0
        %509 = vmatpush1.bf16.msra.mxu0 0
        %510 = vmatprep.subr.bf16.mxu0 0
        %511 = vmatpush1.bf16.msra.mxu0 0
        %512 = vmatprep.subr.bf16.mxu0 0
        %513 = vmatpush1.bf16.msra.mxu0 0
        %514 = vmatprep.mubr.bf16.mxu0 0
        %515 = vmatmul.mubr.bf16.gmra.mrb[0].mxu0 %v413
        %v516 = vpop.f32.mrb[0].mxu0
        %v517 = vadd.f32 %v480, %v516
        %v518 = vpop.f32.mrb[0].mxu0
        %v519 = vpop.f32.mrb[0].mxu0
        %v520 = vpop.f32.mrb[0].mxu0
        %521 = vdwg.mxu0
        %v522 = vtanh.pop %v517
        %v523 = vpack.c.bf16 %v522, %v522
        %v524 = vrot.slane %v306, 2
        %526 = vmatprep.subr.bf16.mxu0 0
        %527 = vmatpush1.bf16.msra.mxu0 %v463
        %528 = vmatprep.subr.bf16.mxu0 0
        %529 = vmatpush1.bf16.msra.mxu0 %v464
        %530 = vmatprep.subr.bf16.mxu0 0
        %531 = vmatpush1.bf16.msra.mxu0 %v465
        %532 = vmatprep.subr.bf16.mxu0 0
        %533 = vmatpush1.bf16.msra.mxu0 %v466
        %534 = vmatprep.subr.bf16.mxu0 0
        %535 = vmatpush1.bf16.msra.mxu0 %v467
        %536 = vmatprep.subr.bf16.mxu0 0
        %537 = vmatpush1.bf16.msra.mxu0 %v468
        %538 = vmatprep.subr.bf16.mxu0 0
        %539 = vmatpush1.bf16.msra.mxu0 %v469
        %540 = vmatprep.subr.bf16.mxu0 0
        %541 = vmatpush1.bf16.msra.mxu0 %v470
        %542 = vmatprep.subr.bf16.mxu0 0
        %543 = vmatpush1.bf16.msra.mxu0 0
        %544 = vmatprep.subr.bf16.mxu0 0
        %545 = vmatpush1.bf16.msra.mxu0 0
        %546 = vmatprep.subr.bf16.mxu0 0
        %547 = vmatpush1.bf16.msra.mxu0 0
        %548 = vmatprep.subr.bf16.mxu0 0
        %549 = vmatpush1.bf16.msra.mxu0 0
        %550 = vmatprep.subr.bf16.mxu0 0
        %551 = vmatpush1.bf16.msra.mxu0 0
        %552 = vmatprep.subr.bf16.mxu0 0
        %553 = vmatpush1.bf16.msra.mxu0 0
        %554 = vmatprep.subr.bf16.mxu0 0
        %555 = vmatpush1.bf16.msra.mxu0 0
        %556 = vmatprep.subr.bf16.mxu0 0
        %557 = vmatpush1.bf16.msra.mxu0 0
        %558 = vmatprep.mubr.bf16.mxu0 0
        %559 = vmatmul.mubr.bf16.gmra.mrb[0].mxu0 %v523
        %v560 = vpop.f32.mrb[0].mxu0
        %v561 = vadd.f32 %v524, %v560
        %v562 = vpop.f32.mrb[0].mxu0
        %v563 = vpop.f32.mrb[0].mxu0
        %v564 = vpop.f32.mrb[0].mxu0
        %565 = vdwg.mxu0
        %v566 = vtanh.pop %v561
        %v567 = vpack.c.bf16 %v566, %v566
        %v568 = vrot.slane %v306, 3
        %570 = vmatprep.subr.bf16.mxu0 0
        %571 = vmatpush1.bf16.msra.mxu0 %v463
        %572 = vmatprep.subr.bf16.mxu0 0
        %573 = vmatpush1.bf16.msra.mxu0 %v464
        %574 = vmatprep.subr.bf16.mxu0 0
        %575 = vmatpush1.bf16.msra.mxu0 %v465
        %576 = vmatprep.subr.bf16.mxu0 0
        %577 = vmatpush1.bf16.msra.mxu0 %v466
        %578 = vmatprep.subr.bf16.mxu0 0
        %579 = vmatpush1.bf16.msra.mxu0 %v467
        %580 = vmatprep.subr.bf16.mxu0 0
        %581 = vmatpush1.bf16.msra.mxu0 %v468
        %582 = vmatprep.subr.bf16.mxu0 0
        %583 = vmatpush1.bf16.msra.mxu0 %v469
        %584 = vmatprep.subr.bf16.mxu0 0
        %585 = vmatpush1.bf16.msra.mxu0 %v470
        %586 = vmatprep.subr.bf16.mxu0 0
        %587 = vmatpush1.bf16.msra.mxu0 0
        %588 = vmatprep.subr.bf16.mxu0 0
        %589 = vmatpush1.bf16.msra.mxu0 0
        %590 = vmatprep.subr.bf16.mxu0 0
        %591 = vmatpush1.bf16.msra.mxu0 0
        %592 = vmatprep.subr.bf16.mxu0 0
        %593 = vmatpush1.bf16.msra.mxu0 0
        %594 = vmatprep.subr.bf16.mxu0 0
        %595 = vmatpush1.bf16.msra.mxu0 0
        %596 = vmatprep.subr.bf16.mxu0 0
        %597 = vmatpush1.bf16.msra.mxu0 0
        %598 = vmatprep.subr.bf16.mxu0 0
        %599 = vmatpush1.bf16.msra.mxu0 0
        %600 = vmatprep.subr.bf16.mxu0 0
        %601 = vmatpush1.bf16.msra.mxu0 0
        %602 = vmatprep.mubr.bf16.mxu0 0
        %603 = vmatmul.mubr.bf16.gmra.mrb[0].mxu0 %v567
        %v604 = vpop.f32.mrb[0].mxu0
        %v605 = vadd.f32 %v568, %v604
        %v606 = vpop.f32.mrb[0].mxu0
        %v607 = vpop.f32.mrb[0].mxu0
        %v608 = vpop.f32.mrb[0].mxu0
        %609 = vdwg.mxu0
        %vm610 = vcmp.gt.f32.partialorder %v605, 0.0
        %v611 = vsel %vm610, 1.0, 0.0
        %v612 = vadd.f32 %v305, %v611
        %v613 = vmul.f32 %v305, 2.0
        %v614 = vmul.f32 %v613, %v611
        %v615 = vsub.f32 %v612, %v614
        %616 = vst [vmem:[#allocation2] sm:$0x1] %v615
        %p617 = scmp.eq.s32.totalorder %s19, 2
        // Predicated region
        $region61: #{tpu_custom_call.1} parent=39 // pred_check
          %p618 = pneg %p617
        $region62: #{tpu_custom_call.1} parent=39 // pred_check_branch
          %620 = sbr.rel (%p618) target = $region64
        $region63: #{tpu_custom_call.1} parent=39 // pred_region
          %v621 = vld [vmem:[#allocation7 + $0x3] sm:$0x1]
          %v622 = vld [vmem:[#allocation7 + $0x4] sm:$0x1]
          %v623 = vld [vmem:[#allocation7 + $0x5] sm:$0x1]
          %v624 = vld [vmem:[#allocation3] sm:$0x1]
          %vm625 = vcmask 1040384
          %v626 = vsel %vm625, %v624, 0.0
          %627 = vadd.xlane.f32.xlu0 %v626
          %v628 = vpop.xlane.xlu0 %627
          %v629 = vld [vmem:[#allocation2] sm:$0x1]
          %v630 = vmul.f32 %v629, %v621
          %v631 = vmul.f32 %v628, %v622
          %v632 = vadd.f32 %v630, %v631
          %v633 = vadd.f32 %v632, %v623
          %634 = vst [vmem:[#allocation11] sm:$0x1] %v633
        $region64: #{tpu_custom_call.1} parent=39 // pred_fallthru
          _
        // Predicated region
        $region65: #{tpu_custom_call.1} parent=39 // pred_check
          %p635 = pneg %p147
        $region66: #{tpu_custom_call.1} parent=39 // pred_check_branch
          %637 = sbr.rel (%p635) target = $region68
        $region67: #{tpu_custom_call.1} parent=39 // pred_region
          %s639 = ssub.s32 16, 16
          %640 = vsyncadd [#allocation6], %s639
          %s642 = sshll.u32 [#allocation11], 4
          %s643 = int_to_ptr.vmem [resolvable:$true] %s642
          %645 = dma.vmem_to_hbm [thread:$0]  %s643, 16, %s5, [#allocation6]
        $region68: #{tpu_custom_call.1} parent=39 // pred_fallthru
          _
        // Predicated region
        $region69: #{tpu_custom_call.1} parent=39 // pred_check
          %p646 = pneg %p147
        $region70: #{tpu_custom_call.1} parent=39 // pred_check_branch
          %648 = sbr.rel (%p646) target = $region72
        $region71: #{tpu_custom_call.1} parent=39 // pred_region
          %649 = dma.done [#allocation6], 16
        $region72: #{tpu_custom_call.1} parent=39 // pred_fallthru
          _
      $region40: #{tpu_custom_call.1} parent=5 // pred_fallthru
        _
      %p650 = scmp.le.s32.totalorder 2, %s14
      // Predicated region
      $region73: #{tpu_custom_call.1} parent=5 // pred_check
        %p651 = pneg %p650
      $region74: #{tpu_custom_call.1} parent=5 // pred_check_branch
        %653 = sbr.rel (%p651) target = $region76
      $region75: #{tpu_custom_call.1} parent=5 // pred_region
        %s654 = ssub.s32 %s14, 2
      $region76: #{tpu_custom_call.1} parent=5 // pred_fallthru
        _
    $region6: #{tpu_custom_call.1} parent=1 // loop_footer
      %s18 = sadd.s32 1, %s14
    $region7: #{tpu_custom_call.1} parent=1 // loop_footer_branch
      %13 = sbr.rel target = $region3
    $region8: #{tpu_custom_call.1} parent=1 // loop_exit
      _
    %655 = vsyncpa [#allocation5], 1
    %s656 = scalar_lea.sflag [#allocation5], 1
    %657 = vsyncpa %s656, 1
    %658 = vsyncpa [#allocation8], 1
    %659 = vsyncpa [#allocation6], 1
    %s660 = scalar_lea.sflag [#allocation6], 1
    %661 = vsyncpa %s660, 1

</llo_original>
